<compile_context>
chip_gen: v5e
topology: v5e:2x2
jax: 0.10.0
libtpu: 0.0.40
codegen_flags: <defaults>
</compile_context>

<pallas_src>
import math

import jax
import jax.numpy as jnp
from jax import lax
from jax.experimental import pallas as pl
from jax.experimental.pallas import tpu as pltpu

LEAKY_SLOPE = 0.01
BN_EPS = 1e-5


def _pad128(d: int) -> int:
    return ((d + 127) // 128) * 128


def _pad16(d: int) -> int:
    return ((d + 15) // 16) * 16


# ----------------------------- fused Pallas kernel --------------------------

def _make_fused_kernel(n_hidden: int, n_rows: int, n_rows_pad: int):
    """Fused (Linear + BN(train) + LeakyReLU) * n_hidden + final Linear."""
    inv_n = 1.0 / float(n_rows)
    need_mask = n_rows_pad > n_rows

    def kernel(*refs):
        x_ref = refs[0]
        o_ref = refs[-1]
        h = x_ref[...]                                   # bf16 (rows_pad, P0)

        if need_mask:
            # Padded rows must stay exactly zero so BN batch stats (over the
            # real rows only, via inv_n) are untouched layer after layer.
            row_ids = lax.broadcasted_iota(jnp.int32, (n_rows_pad, 1), 0)
            row_mask = (row_ids < n_rows).astype(jnp.float32)

        idx = 1
        for _ in range(n_hidden):
            w_ref, gb_ref = refs[idx], refs[idx + 1]
            idx += 2
            # Linear on the MXU (no bias: cancelled exactly by BN mean subtraction).
            y = jnp.dot(h, w_ref[...], preferred_element_type=jnp.float32)
            # BatchNorm1d (training stats, biased var), single pass, f32.
            mean = jnp.sum(y, axis=0, keepdims=True) * inv_n
            ex2 = jnp.sum(y * y, axis=0, keepdims=True) * inv_n
            var = jnp.maximum(ex2 - mean * mean, 0.0)    # clamp: f32 cancellation
            gb = gb_ref[...]                             # (2, p_out): [gamma; beta]
            scale = gb[0:1, :] * lax.rsqrt(var + BN_EPS) # rsqrt rides the EUP
            shift = gb[1:2, :] - mean * scale
            y = y * scale + shift
            # LeakyReLU(0.01); emit next layer's bf16 activation directly.
            y = jnp.where(y > 0, y, LEAKY_SLOPE * y)
            if need_mask:
                y = y * row_mask
            h = y.astype(jnp.bfloat16)

        # Dropout1d(p=0.01): identity (see TODO at top of file).
        w_ref, b_ref = refs[idx], refs[idx + 1]
        y = jnp.dot(h, w_ref[...], preferred_element_type=jnp.float32)
        o_ref[...] = y + b_ref[...]

    return kernel


# ----------------------------- parameter setup ------------------------------

def init_params(spec, key):
    """Deterministic init mirroring the module shapes (128-lane padded).

    Hidden blocks i = 0..len(spec)-3: Linear(spec[i], spec[i+1]) + BN(spec[i+1]).
    The hidden Linear bias is NOT materialized (exactly cancelled by training-mode
    BN). Final: Linear(spec[-2], spec[-1]) with bias.
    Weights stored (fan_in_pad, fan_out_pad) bf16, zero-padded; gamma/beta packed
    as a (2, fan_out_pad) f32 array per layer with padded lanes zero so padded
    columns provably stay zero through every block.
    """
    pspec = [_pad128(d) for d in spec]
    params = {"spec": list(spec), "pspec": pspec, "hidden": [], "final": None}
    keys = jax.random.split(key, len(spec) - 1)
    for i in range(len(spec) - 2):
        fan_in, fan_out = spec[i], spec[i + 1]
        p_in, p_out = pspec[i], pspec[i + 1]
        bound = 1.0 / math.sqrt(fan_in)
        w_u = jax.random.uniform(keys[i], (fan_in, fan_out), jnp.float32, -bound, bound)
        w = jnp.zeros((p_in, p_out), jnp.float32).at[:fan_in, :fan_out].set(w_u)
        w = w.astype(jnp.bfloat16)
        gb = jnp.zeros((2, p_out), jnp.float32).at[0, :fan_out].set(1.0)  # gamma=1, beta=0
        params["hidden"].append((w, gb))
    fan_in, fan_out = spec[-2], spec[-1]
    p_in, p_out = pspec[-2], pspec[-1]
    bound = 1.0 / math.sqrt(fan_in)
    kw, kb = jax.random.split(keys[-1])
    w_u = jax.random.uniform(kw, (fan_in, fan_out), jnp.float32, -bound, bound)
    b_u = jax.random.uniform(kb, (1, fan_out), jnp.float32, -bound, bound)
    w = jnp.zeros((p_in, p_out), jnp.float32).at[:fan_in, :fan_out].set(w_u)
    w = w.astype(jnp.bfloat16)
    b = jnp.zeros((1, p_out), jnp.float32).at[:, :fan_out].set(b_u)
    params["final"] = (w, b)
    return params


# ------------------------------- forward pass --------------------------------

def _full_spec(shape):
    nd = len(shape)
    return pl.BlockSpec(shape, lambda i, _nd=nd: (0,) * _nd)


def _fused_forward(params, x2d):
    spec, pspec = params["spec"], params["pspec"]
    rows, d_in = x2d.shape
    p_in = pspec[0]
    p_out = pspec[-1]
    rows_pad = _pad16(rows)          # bf16 sublane granule; padded rows stay zero

    # Lane-dense, zero-padded, bf16 input activations (cast once, outside the loop).
    x_p = jnp.pad(x2d.astype(jnp.bfloat16),
                  ((0, rows_pad - rows), (0, p_in - d_in)))

    inputs = [x_p]
    in_specs = [_full_spec(x_p.shape)]

    # Cost estimate from TRUE (unpadded) dims.
    flops = 0
    transcendentals = 0
    bytes_accessed = rows * d_in * 2
    for li, (w, gb) in enumerate(params["hidden"]):
        fan_in, fan_out = spec[li], spec[li + 1]
        inputs += [w, gb]
        in_specs += [_full_spec(w.shape), _full_spec(gb.shape)]
        flops += 2 * rows * fan_in * fan_out + 10 * rows * fan_out
        transcendentals += fan_out                       # one rsqrt per column
        bytes_accessed += fan_in * fan_out * 2 + 2 * fan_out * 4
    wf, bf = params["final"]
    inputs += [wf, bf]
    in_specs += [_full_spec(wf.shape), _full_spec(bf.shape)]
    flops += 2 * rows * spec[-2] * spec[-1] + rows * spec[-1]
    bytes_accessed += spec[-2] * spec[-1] * 2 + spec[-1] * 4 + rows * spec[-1] * 4

    out = pl.pallas_call(
        _make_fused_kernel(len(params["hidden"]), rows, rows_pad),
        out_shape=jax.ShapeDtypeStruct((rows_pad, p_out), jnp.float32),
        grid=(1,),
        in_specs=in_specs,
        out_specs=_full_spec((rows_pad, p_out)),
        compiler_params=pltpu.CompilerParams(
            dimension_semantics=("arbitrary",),
            vmem_limit_bytes=32 * 1024 * 1024),
        cost_estimate=pl.CostEstimate(
            flops=int(flops),
            transcendentals=int(transcendentals),
            bytes_accessed=int(bytes_accessed)),
    )(*inputs)

    return out[:rows, :spec[-1]]


def forward(params, signal):
    if signal.ndim == 2:
        return _fused_forward(params, signal)
    elif signal.ndim == 3:
        n, m, d = signal.shape
        out = _fused_forward(params, signal.reshape(n * m, d))
        # Note: the torch module reshapes to the *input* feature dim d, which
        # only works when spec[-1] == spec[0]; use the true output dim here.
        return out.reshape(n, m, out.shape[-1])
    else:
        raise ValueError("signal must be 2-D or 3-D")


# ------------------------------ pure-JAX reference ---------------------------

def _reference(params, x2d):
    """Same math as the kernel (bf16 MXU inputs, single-pass BN) in plain JAX."""
    spec, pspec = params["spec"], params["pspec"]
    rows = x2d.shape[0]
    inv_n = 1.0 / rows
    h = jnp.pad(x2d.astype(jnp.bfloat16), ((0, 0), (0, pspec[0] - spec[0])))
    for (w, gb) in params["hidden"]:
        y = jnp.dot(h, w, preferred_element_type=jnp.float32)
        mean = jnp.sum(y, axis=0, keepdims=True) * inv_n
        var = jnp.maximum(
            jnp.sum(y * y, axis=0, keepdims=True) * inv_n - mean * mean, 0.0)
        scale = gb[0:1, :] * lax.rsqrt(var + BN_EPS)
        shift = gb[1:2, :] - mean * scale
        y = y * scale + shift
        h = jnp.where(y > 0, y, LEAKY_SLOPE * y).astype(jnp.bfloat16)
    w, b = params["final"]
    y = jnp.dot(h, w, preferred_element_type=jnp.float32) + b
    return y[:, :spec[-1]]


# ----------------------------------- main ------------------------------------

if __name__ == "__main__":
    spec = [16, 32, 64, 8]   # Linear(16,32)+BN+LReLU, Linear(32,64)+BN+LReLU, Dropout, Linear(64,8)
    batch = 8

    key = jax.random.PRNGKey(0)
    kx, kp = jax.random.split(key)
    x = jax.random.normal(kx, (batch, spec[0]), dtype=jnp.float32)
    params = init_params(spec, kp)

    # 2-D path
    out = forward(params, x)
    out = jax.block_until_ready(out)
    ref = _reference(params, x)
    assert out.shape == (batch, spec[-1])
    assert jnp.allclose(out, ref, atol=1e-3, rtol=1e-3), "2-D mismatch vs reference"

    # 3-D path (flatten -> layers -> reshape), n*m rows share the BN statistics.
    x3 = x.reshape(2, 4, spec[0])
    out3 = jax.block_until_ready(forward(params, x3))
    assert out3.shape == (2, 4, spec[-1])
    assert jnp.allclose(out3.reshape(batch, spec[-1]), ref, atol=1e-3, rtol=1e-3), \
        "3-D mismatch vs reference"

    print("KERNEL_OK")
</pallas_src>

<mosaic_0001>
module attributes {stable_mosaic.version = 11 : i64} {
  func.func @kernel(%arg0: i32, %arg1: memref<16x128xbf16, #tpu.memory_space<vmem>>, %arg2: memref<128x128xbf16, #tpu.memory_space<vmem>>, %arg3: memref<2x128xf32, #tpu.memory_space<vmem>>, %arg4: memref<128x128xbf16, #tpu.memory_space<vmem>>, %arg5: memref<2x128xf32, #tpu.memory_space<vmem>>, %arg6: memref<128x128xbf16, #tpu.memory_space<vmem>>, %arg7: memref<1x128xf32, #tpu.memory_space<vmem>>, %arg8: memref<16x128xf32, #tpu.memory_space<vmem>>) attributes {dimension_semantics = [#tpu.dimension_semantics<arbitrary>], iteration_bounds = array<i64: 1>, scalar_prefetch = 0 : i64, scratch_operands = 0 : i64, tpu.core_type = #tpu.core_type<tc>, window_params = [{pipeline_mode = #tpu.pipeline_mode<synchronous>, transform_indices = @transform_0, window_bounds = array<i64: 16, 128>}, {pipeline_mode = #tpu.pipeline_mode<synchronous>, transform_indices = @transform_1, window_bounds = array<i64: 128, 128>}, {pipeline_mode = #tpu.pipeline_mode<synchronous>, transform_indices = @transform_2, window_bounds = array<i64: 2, 128>}, {pipeline_mode = #tpu.pipeline_mode<synchronous>, transform_indices = @transform_3, window_bounds = array<i64: 128, 128>}, {pipeline_mode = #tpu.pipeline_mode<synchronous>, transform_indices = @transform_4, window_bounds = array<i64: 2, 128>}, {pipeline_mode = #tpu.pipeline_mode<synchronous>, transform_indices = @transform_5, window_bounds = array<i64: 128, 128>}, {pipeline_mode = #tpu.pipeline_mode<synchronous>, transform_indices = @transform_6, window_bounds = array<i64: 1, 128>}, {pipeline_mode = #tpu.pipeline_mode<synchronous>, transform_indices = @transform_7, window_bounds = array<i64: 16, 128>}]} {
    %c0 = arith.constant 0 : index
    %c0_0 = arith.constant 0 : index
    %0 = vector.load %arg1[%c0, %c0_0] : memref<16x128xbf16, #tpu.memory_space<vmem>>, vector<16x128xbf16>
    %1 = tpu.iota {dimensions = array<i32: 0>} : vector<16x1xi32>
    %c8_i32 = arith.constant 8 : i32
    %2 = vector.broadcast %c8_i32 : i32 to vector<16x1xi32>
    %3 = arith.cmpi slt, %1, %2 : vector<16x1xi32>
    %4 = arith.extui %3 : vector<16x1xi1> to vector<16x1xi32>
    %5 = arith.sitofp %4 : vector<16x1xi32> to vector<16x1xf32>
    %c0_1 = arith.constant 0 : index
    %c0_2 = arith.constant 0 : index
    %6 = vector.load %arg2[%c0_1, %c0_2] : memref<128x128xbf16, #tpu.memory_space<vmem>>, vector<128x128xbf16>
    %cst = arith.constant dense<0.000000e+00> : vector<16x128xf32>
    %7 = tpu.matmul %0, %6, %cst {dimension_numbers = #tpu.dot_dimension_numbers<[1], [0], [0], [1], [0, 0, 1, 1], [], []>} : vector<16x128xbf16>, vector<128x128xbf16>, vector<16x128xf32> -> vector<16x128xf32>
    %cst_3 = arith.constant dense<0.000000e+00> : vector<128xf32>
    %8 = vector.multi_reduction <add>, %7, %cst_3 [0] : vector<16x128xf32> to vector<128xf32>
    %9 = vector.shape_cast %8 : vector<128xf32> to vector<1x128xf32>
    %cst_4 = arith.constant 1.250000e-01 : f32
    %10 = vector.broadcast %cst_4 : f32 to vector<1x128xf32>
    %11 = arith.mulf %9, %10 : vector<1x128xf32>
    %12 = arith.mulf %7, %7 : vector<16x128xf32>
    %cst_5 = arith.constant dense<0.000000e+00> : vector<128xf32>
    %13 = vector.multi_reduction <add>, %12, %cst_5 [0] : vector<16x128xf32> to vector<128xf32>
    %14 = vector.shape_cast %13 : vector<128xf32> to vector<1x128xf32>
    %cst_6 = arith.constant 1.250000e-01 : f32
    %15 = vector.broadcast %cst_6 : f32 to vector<1x128xf32>
    %16 = arith.mulf %14, %15 : vector<1x128xf32>
    %17 = arith.mulf %11, %11 : vector<1x128xf32>
    %18 = arith.subf %16, %17 : vector<1x128xf32>
    %cst_7 = arith.constant 0.000000e+00 : f32
    %19 = vector.broadcast %cst_7 : f32 to vector<1x128xf32>
    %20 = arith.maximumf %18, %19 : vector<1x128xf32>
    %c0_8 = arith.constant 0 : index
    %c0_9 = arith.constant 0 : index
    %21 = vector.load %arg3[%c0_8, %c0_9] : memref<2x128xf32, #tpu.memory_space<vmem>>, vector<2x128xf32>
    %22 = vector.extract_strided_slice %21 {offsets = [0, 0], sizes = [1, 128], strides = [1, 1]} : vector<2x128xf32> to vector<1x128xf32>
    %cst_10 = arith.constant 9.99999974E-6 : f32
    %23 = vector.broadcast %cst_10 : f32 to vector<1x128xf32>
    %24 = arith.addf %20, %23 : vector<1x128xf32>
    %25 = math.rsqrt %24 : vector<1x128xf32>
    %26 = arith.mulf %22, %25 : vector<1x128xf32>
    %27 = vector.extract_strided_slice %21 {offsets = [1, 0], sizes = [1, 128], strides = [1, 1]} : vector<2x128xf32> to vector<1x128xf32>
    %28 = arith.mulf %11, %26 : vector<1x128xf32>
    %29 = arith.subf %27, %28 : vector<1x128xf32>
    %30 = vector.broadcast %26 : vector<1x128xf32> to vector<16x128xf32>
    %31 = arith.mulf %7, %30 : vector<16x128xf32>
    %32 = vector.broadcast %29 : vector<1x128xf32> to vector<16x128xf32>
    %33 = arith.addf %31, %32 : vector<16x128xf32>
    %cst_11 = arith.constant 0.000000e+00 : f32
    %34 = vector.broadcast %cst_11 : f32 to vector<16x128xf32>
    %35 = arith.cmpf ogt, %33, %34 : vector<16x128xf32>
    %cst_12 = arith.constant 0.00999999977 : f32
    %36 = vector.broadcast %cst_12 : f32 to vector<16x128xf32>
    %37 = arith.mulf %36, %33 : vector<16x128xf32>
    %38 = arith.select %35, %33, %37 : vector<16x128xi1>, vector<16x128xf32>
    %39 = vector.broadcast %5 : vector<16x1xf32> to vector<16x128xf32>
    %40 = arith.mulf %38, %39 : vector<16x128xf32>
    %41 = arith.truncf %40 : vector<16x128xf32> to vector<16x128xbf16>
    %c0_13 = arith.constant 0 : index
    %c0_14 = arith.constant 0 : index
    %42 = vector.load %arg4[%c0_13, %c0_14] : memref<128x128xbf16, #tpu.memory_space<vmem>>, vector<128x128xbf16>
    %cst_15 = arith.constant dense<0.000000e+00> : vector<16x128xf32>
    %43 = tpu.matmul %41, %42, %cst_15 {dimension_numbers = #tpu.dot_dimension_numbers<[1], [0], [0], [1], [0, 0, 1, 1], [], []>} : vector<16x128xbf16>, vector<128x128xbf16>, vector<16x128xf32> -> vector<16x128xf32>
    %cst_16 = arith.constant dense<0.000000e+00> : vector<128xf32>
    %44 = vector.multi_reduction <add>, %43, %cst_16 [0] : vector<16x128xf32> to vector<128xf32>
    %45 = vector.shape_cast %44 : vector<128xf32> to vector<1x128xf32>
    %cst_17 = arith.constant 1.250000e-01 : f32
    %46 = vector.broadcast %cst_17 : f32 to vector<1x128xf32>
    %47 = arith.mulf %45, %46 : vector<1x128xf32>
    %48 = arith.mulf %43, %43 : vector<16x128xf32>
    %cst_18 = arith.constant dense<0.000000e+00> : vector<128xf32>
    %49 = vector.multi_reduction <add>, %48, %cst_18 [0] : vector<16x128xf32> to vector<128xf32>
    %50 = vector.shape_cast %49 : vector<128xf32> to vector<1x128xf32>
    %cst_19 = arith.constant 1.250000e-01 : f32
    %51 = vector.broadcast %cst_19 : f32 to vector<1x128xf32>
    %52 = arith.mulf %50, %51 : vector<1x128xf32>
    %53 = arith.mulf %47, %47 : vector<1x128xf32>
    %54 = arith.subf %52, %53 : vector<1x128xf32>
    %cst_20 = arith.constant 0.000000e+00 : f32
    %55 = vector.broadcast %cst_20 : f32 to vector<1x128xf32>
    %56 = arith.maximumf %54, %55 : vector<1x128xf32>
    %c0_21 = arith.constant 0 : index
    %c0_22 = arith.constant 0 : index
    %57 = vector.load %arg5[%c0_21, %c0_22] : memref<2x128xf32, #tpu.memory_space<vmem>>, vector<2x128xf32>
    %58 = vector.extract_strided_slice %57 {offsets = [0, 0], sizes = [1, 128], strides = [1, 1]} : vector<2x128xf32> to vector<1x128xf32>
    %cst_23 = arith.constant 9.99999974E-6 : f32
    %59 = vector.broadcast %cst_23 : f32 to vector<1x128xf32>
    %60 = arith.addf %56, %59 : vector<1x128xf32>
    %61 = math.rsqrt %60 : vector<1x128xf32>
    %62 = arith.mulf %58, %61 : vector<1x128xf32>
    %63 = vector.extract_strided_slice %57 {offsets = [1, 0], sizes = [1, 128], strides = [1, 1]} : vector<2x128xf32> to vector<1x128xf32>
    %64 = arith.mulf %47, %62 : vector<1x128xf32>
    %65 = arith.subf %63, %64 : vector<1x128xf32>
    %66 = vector.broadcast %62 : vector<1x128xf32> to vector<16x128xf32>
    %67 = arith.mulf %43, %66 : vector<16x128xf32>
    %68 = vector.broadcast %65 : vector<1x128xf32> to vector<16x128xf32>
    %69 = arith.addf %67, %68 : vector<16x128xf32>
    %cst_24 = arith.constant 0.000000e+00 : f32
    %70 = vector.broadcast %cst_24 : f32 to vector<16x128xf32>
    %71 = arith.cmpf ogt, %69, %70 : vector<16x128xf32>
    %cst_25 = arith.constant 0.00999999977 : f32
    %72 = vector.broadcast %cst_25 : f32 to vector<16x128xf32>
    %73 = arith.mulf %72, %69 : vector<16x128xf32>
    %74 = arith.select %71, %69, %73 : vector<16x128xi1>, vector<16x128xf32>
    %75 = vector.broadcast %5 : vector<16x1xf32> to vector<16x128xf32>
    %76 = arith.mulf %74, %75 : vector<16x128xf32>
    %77 = arith.truncf %76 : vector<16x128xf32> to vector<16x128xbf16>
    %c0_26 = arith.constant 0 : index
    %c0_27 = arith.constant 0 : index
    %78 = vector.load %arg6[%c0_26, %c0_27] : memref<128x128xbf16, #tpu.memory_space<vmem>>, vector<128x128xbf16>
    %cst_28 = arith.constant dense<0.000000e+00> : vector<16x128xf32>
    %79 = tpu.matmul %77, %78, %cst_28 {dimension_numbers = #tpu.dot_dimension_numbers<[1], [0], [0], [1], [0, 0, 1, 1], [], []>} : vector<16x128xbf16>, vector<128x128xbf16>, vector<16x128xf32> -> vector<16x128xf32>
    %c0_29 = arith.constant 0 : index
    %c0_30 = arith.constant 0 : index
    %80 = vector.load %arg7[%c0_29, %c0_30] : memref<1x128xf32, #tpu.memory_space<vmem>>, vector<1x128xf32>
    %81 = vector.broadcast %80 : vector<1x128xf32> to vector<16x128xf32>
    %82 = arith.addf %79, %81 : vector<16x128xf32>
    %c0_31 = arith.constant 0 : index
    %c0_32 = arith.constant 0 : index
    %83 = vector.load %arg8[%c0_31, %c0_32] : memref<16x128xf32, #tpu.memory_space<vmem>>, vector<16x128xf32>
    tpu.vector_store %arg8[%c0_31, %c0_32], %82 {strides = array<i32>} : memref<16x128xf32, #tpu.memory_space<vmem>>, vector<16x128xf32>,
    return
  }
  func.func @transform_0(%arg0: i32) -> (i32, i32) {
    %c0_i32 = arith.constant 0 : i32
    %c0_i32_0 = arith.constant 0 : i32
    %c0_i32_1 = arith.constant 0 : i32
    return %c0_i32, %c0_i32_0 : i32, i32
  }
  func.func @transform_1(%arg0: i32) -> (i32, i32) {
    %c0_i32 = arith.constant 0 : i32
    %c0_i32_0 = arith.constant 0 : i32
    %c0_i32_1 = arith.constant 0 : i32
    return %c0_i32, %c0_i32_0 : i32, i32
  }
  func.func @transform_2(%arg0: i32) -> (i32, i32) {
    %c0_i32 = arith.constant 0 : i32
    %c0_i32_0 = arith.constant 0 : i32
    %c0_i32_1 = arith.constant 0 : i32
    return %c0_i32, %c0_i32_0 : i32, i32
  }
  func.func @transform_3(%arg0: i32) -> (i32, i32) {
    %c0_i32 = arith.constant 0 : i32
    %c0_i32_0 = arith.constant 0 : i32
    %c0_i32_1 = arith.constant 0 : i32
    return %c0_i32, %c0_i32_0 : i32, i32
  }
  func.func @transform_4(%arg0: i32) -> (i32, i32) {
    %c0_i32 = arith.constant 0 : i32
    %c0_i32_0 = arith.constant 0 : i32
    %c0_i32_1 = arith.constant 0 : i32
    return %c0_i32, %c0_i32_0 : i32, i32
  }
  func.func @transform_5(%arg0: i32) -> (i32, i32) {
    %c0_i32 = arith.constant 0 : i32
    %c0_i32_0 = arith.constant 0 : i32
    %c0_i32_1 = arith.constant 0 : i32
    return %c0_i32, %c0_i32_0 : i32, i32
  }
  func.func @transform_6(%arg0: i32) -> (i32, i32) {
    %c0_i32 = arith.constant 0 : i32
    %c0_i32_0 = arith.constant 0 : i32
    %c0_i32_1 = arith.constant 0 : i32
    return %c0_i32, %c0_i32_0 : i32, i32
  }
  func.func @transform_7(%arg0: i32) -> (i32, i32) {
    %c0_i32 = arith.constant 0 : i32
    %c0_i32_0 = arith.constant 0 : i32
    %c0_i32_1 = arith.constant 0 : i32
    return %c0_i32, %c0_i32_0 : i32, i32
  }
}

</mosaic_0001>

<llo_original>
// kernel: tpu_custom_call.1
$region0: #{tpu_custom_call.1}
  #allocation0 [shape = 'u32[]', space=smem, size = 0x4, offset = 0x4, fixed_abs, tag = 'smem constant byte address 0x4 - core index']
  #allocation1 [shape = 'u32[72,128]{1,0:T(1,128)}', space=vmem, size = 0x9000, scoped, tag = 'internal scratch']
  %s0 = inlined_call_operand.hbm [shape: bf16[16,128], index: 0, kind: input, shape index: {}]
  %s1 = inlined_call_operand.hbm [shape: bf16[128,128], index: 1, kind: input, shape index: {}]
  %s2 = inlined_call_operand.hbm [shape: f32[2,128], index: 2, kind: input, shape index: {}]
  %s3 = inlined_call_operand.hbm [shape: bf16[128,128], index: 3, kind: input, shape index: {}]
  %s4 = inlined_call_operand.vmem [shape: f32[2,128], index: 4, kind: input, shape index: {}]
  %s5 = inlined_call_operand.hbm [shape: bf16[128,128], index: 5, kind: input, shape index: {}]
  %s6 = inlined_call_operand.vmem [shape: f32[1,128], index: 6, kind: input, shape index: {}]
  %s7 = inlined_call_operand.hbm [shape: f32[16,128], index: 7, kind: output, shape index: {}]
  %s8 = sld [smem:[#allocation0]]
  $region58: #{tpu_custom_call.1} parent=0
    _
  %s10 = ssub.s32 1, %s8
  %s11 = scalar_select 0, %s10, %s8
  $region1: #{tpu_custom_call.1} parent=0
    #allocation2 [shape = 'u8[4096]{0}', space=vmem, size = 0x1000, scoped, tag = 'input window, operand 0, single buffered']
    #allocation3 [shape = 's32[1]{0}', space=sflag, size = 0x4, scoped, tag = 'scoped memory for tpu_custom_call.1']
    #allocation4 [shape = 's32[1]{0}', space=sflag, size = 0x4, scoped, tag = 'scoped memory for tpu_custom_call.1']
    #allocation5 [shape = 'u8[32768]{0}', space=vmem, size = 0x8000, scoped, tag = 'input window, operand 1, single buffered']
    #allocation6 [shape = 's32[1]{0}', space=sflag, size = 0x4, scoped, tag = 'scoped memory for tpu_custom_call.1']
    #allocation7 [shape = 'u8[1024]{0}', space=vmem, size = 0x400, scoped, tag = 'input window, operand 2, single buffered']
    #allocation8 [shape = 'u8[32768]{0}', space=vmem, size = 0x8000, scoped, tag = 'input window, operand 3, single buffered']
    #allocation9 [shape = 's32[1]{0}', space=sflag, size = 0x4, scoped, tag = 'scoped memory for tpu_custom_call.1']
    #allocation10 [shape = 'u8[32768]{0}', space=vmem, size = 0x8000, scoped, tag = 'input window, operand 5, single buffered']
    #allocation11 [shape = 'u8[8192]{0}', space=vmem, size = 0x2000, scoped, tag = 'output window, operand 0, single buffered']
    %12 = vsyncpa [#allocation3], 0
    %13 = vsyncpa [#allocation6], 0
    %14 = vsyncpa [#allocation9], 0
    %15 = vsyncpa [#allocation4], 0
    // Predicated region
    $region2: #{tpu_custom_call.1} parent=1 // pred_check
      _
    $region3: #{tpu_custom_call.1} parent=1 // pred_check_branch
      %17 = sbr.rel (0) target = $region5
    $region4: #{tpu_custom_call.1} parent=1 // pred_region
      %19 = vsyncadd [#allocation3], 0
      %s20 = sshll.u32 %s0, 4
      %s21 = int_to_ptr.hbm [resolvable:$true] %s20
      %s22 = sshll.u32 [#allocation2], 4
      %s23 = int_to_ptr.vmem [resolvable:$true] %s22
      %28 = dma.hbm_to_vmem [thread:$0]  %s21, 128, %s23, [#allocation3], 64, 64, 4
    $region5: #{tpu_custom_call.1} parent=1 // pred_fallthru
      _
    // Predicated region
    $region6: #{tpu_custom_call.1} parent=1 // pred_check
      _
    $region7: #{tpu_custom_call.1} parent=1 // pred_check_branch
      %30 = sbr.rel (0) target = $region9
    $region8: #{tpu_custom_call.1} parent=1 // pred_region
      %32 = vsyncadd [#allocation6], 0
      %s33 = sshll.u32 %s1, 4
      %s34 = int_to_ptr.hbm [resolvable:$true] %s33
      %s35 = sshll.u32 [#allocation5], 4
      %s36 = int_to_ptr.vmem [resolvable:$true] %s35
      %41 = dma.hbm_to_vmem [thread:$0]  %s34, 1024, %s36, [#allocation6], 64, 64, 4
    $region9: #{tpu_custom_call.1} parent=1 // pred_fallthru
      _
    // Predicated region
    $region10: #{tpu_custom_call.1} parent=1 // pred_check
      _
    $region11: #{tpu_custom_call.1} parent=1 // pred_check_branch
      %43 = sbr.rel (0) target = $region13
    $region12: #{tpu_custom_call.1} parent=1 // pred_region
      %45 = vsyncadd [#allocation6], 0
      %s47 = sshll.u32 %s2, 4
      %s48 = int_to_ptr.hbm [resolvable:$true] %s47
      %s49 = sshll.u32 [#allocation7], 4
      %s50 = int_to_ptr.vmem [resolvable:$true] %s49
      %52 = dma.hbm_to_vmem [thread:$0]  %s48, 32, %s50, [#allocation6]
    $region13: #{tpu_custom_call.1} parent=1 // pred_fallthru
      _
    // Predicated region
    $region14: #{tpu_custom_call.1} parent=1 // pred_check
      _
    $region15: #{tpu_custom_call.1} parent=1 // pred_check_branch
      %54 = sbr.rel (0) target = $region17
    $region16: #{tpu_custom_call.1} parent=1 // pred_region
      %56 = vsyncadd [#allocation9], 0
      %s57 = sshll.u32 %s3, 4
      %s58 = int_to_ptr.hbm [resolvable:$true] %s57
      %s59 = sshll.u32 [#allocation8], 4
      %s60 = int_to_ptr.vmem [resolvable:$true] %s59
      %65 = dma.hbm_to_vmem [thread:$0]  %s58, 1024, %s60, [#allocation9], 64, 64, 4
    $region17: #{tpu_custom_call.1} parent=1 // pred_fallthru
      _
    // Predicated region
    $region18: #{tpu_custom_call.1} parent=1 // pred_check
      _
    $region19: #{tpu_custom_call.1} parent=1 // pred_check_branch
      %67 = sbr.rel (0) target = $region21
    $region20: #{tpu_custom_call.1} parent=1 // pred_region
      _
    $region21: #{tpu_custom_call.1} parent=1 // pred_fallthru
      _
    // Predicated region
    $region22: #{tpu_custom_call.1} parent=1 // pred_check
      _
    $region23: #{tpu_custom_call.1} parent=1 // pred_check_branch
      %69 = sbr.rel (0) target = $region25
    $region24: #{tpu_custom_call.1} parent=1 // pred_region
      %71 = vsyncadd [#allocation9], 0
      %s72 = sshll.u32 %s5, 4
      %s73 = int_to_ptr.hbm [resolvable:$true] %s72
      %s74 = sshll.u32 [#allocation10], 4
      %s75 = int_to_ptr.vmem [resolvable:$true] %s74
      %80 = dma.hbm_to_vmem [thread:$0]  %s73, 1024, %s75, [#allocation9], 64, 64, 4
    $region25: #{tpu_custom_call.1} parent=1 // pred_fallthru
      _
    // Predicated region
    $region26: #{tpu_custom_call.1} parent=1 // pred_check
      _
    $region27: #{tpu_custom_call.1} parent=1 // pred_check_branch
      %82 = sbr.rel (0) target = $region29
    $region28: #{tpu_custom_call.1} parent=1 // pred_region
      _
    $region29: #{tpu_custom_call.1} parent=1 // pred_fallthru
      _
    // Predicated region
    $region30: #{tpu_custom_call.1} parent=1 // pred_check
      _
    $region31: #{tpu_custom_call.1} parent=1 // pred_check_branch
      %84 = sbr.rel (0) target = $region33
    $region32: #{tpu_custom_call.1} parent=1 // pred_region
      %86 = dma.done [#allocation3], 128
    $region33: #{tpu_custom_call.1} parent=1 // pred_fallthru
      _
    // Predicated region
    $region34: #{tpu_custom_call.1} parent=1 // pred_check
      _
    $region35: #{tpu_custom_call.1} parent=1 // pred_check_branch
      %88 = sbr.rel (0) target = $region37
    $region36: #{tpu_custom_call.1} parent=1 // pred_region
      %90 = dma.done [#allocation6], 1024
    $region37: #{tpu_custom_call.1} parent=1 // pred_fallthru
      _
    // Predicated region
    $region38: #{tpu_custom_call.1} parent=1 // pred_check
      _
    $region39: #{tpu_custom_call.1} parent=1 // pred_check_branch
      %92 = sbr.rel (0) target = $region41
    $region40: #{tpu_custom_call.1} parent=1 // pred_region
      %94 = dma.done [#allocation6], 32
    $region41: #{tpu_custom_call.1} parent=1 // pred_fallthru
      _
    // Predicated region
    $region42: #{tpu_custom_call.1} parent=1 // pred_check
      _
    $region43: #{tpu_custom_call.1} parent=1 // pred_check_branch
      %96 = sbr.rel (0) target = $region45
    $region44: #{tpu_custom_call.1} parent=1 // pred_region
      %98 = dma.done [#allocation9], 1024
    $region45: #{tpu_custom_call.1} parent=1 // pred_fallthru
      _
    // Predicated region
    $region46: #{tpu_custom_call.1} parent=1 // pred_check
      _
    $region47: #{tpu_custom_call.1} parent=1 // pred_check_branch
      %100 = sbr.rel (0) target = $region49
    $region48: #{tpu_custom_call.1} parent=1 // pred_region
      %102 = dma.done [#allocation9], 1024
    $region49: #{tpu_custom_call.1} parent=1 // pred_fallthru
      _
    %v103 = vld [vmem:[#allocation2] sm:$0xf]
    %v104 = vld [vmem:[#allocation2 + $0x4] sm:$0xf]
    %v105 = vlaneseq
    %v106 = vshrl.u32 %v105, 7
    %v107 = vadd.s32 %v106, 8
    %vm108 = vcmp.lt.s32.totalorder %v106, 8
    %vm109 = vcmp.lt.s32.totalorder %v107, 8
    %v110 = vsel %vm108, 1, 0
    %v111 = vsel %vm109, 1, 0
    %v112 = vcvt.s32.f32 %v110
    %v113 = vcvt.s32.f32 %v111
    %v114 = vld [vmem:[#allocation5] sm:$0xf]
    %v115 = vld [vmem:[#allocation5 + $0x4] sm:$0xf]
    %v116 = vld [vmem:[#allocation5 + $0x8] sm:$0xf]
    %v117 = vld [vmem:[#allocation5 + $0xc] sm:$0xf]
    %v118 = vld [vmem:[#allocation5 + $0x10] sm:$0xf]
    %v119 = vld [vmem:[#allocation5 + $0x14] sm:$0xf]
    %v120 = vld [vmem:[#allocation5 + $0x18] sm:$0xf]
    %v121 = vld [vmem:[#allocation5 + $0x1c] sm:$0xf]
    %v122 = vld [vmem:[#allocation5 + $0x20] sm:$0xf]
    %v123 = vld [vmem:[#allocation5 + $0x24] sm:$0xf]
    %v124 = vld [vmem:[#allocation5 + $0x28] sm:$0xf]
    %v125 = vld [vmem:[#allocation5 + $0x2c] sm:$0xf]
    %v126 = vld [vmem:[#allocation5 + $0x30] sm:$0xf]
    %v127 = vld [vmem:[#allocation5 + $0x34] sm:$0xf]
    %v128 = vld [vmem:[#allocation5 + $0x38] sm:$0xf]
    %v129 = vld [vmem:[#allocation5 + $0x3c] sm:$0xf]
    %v132 = vunpack.c.l.b16 %v103
    %v133 = vunpack.c.l.b16 %v104
    %v134 = vpack.c.b16 %v133, %v132
    %v152 = vunpack.c.l.b16 %v114
    %v153 = vunpack.c.l.b16 %v115
    %v154 = vunpack.c.l.b16 %v116
    %v155 = vunpack.c.l.b16 %v117
    %v156 = vunpack.c.l.b16 %v118
    %v157 = vunpack.c.l.b16 %v119
    %v158 = vunpack.c.l.b16 %v120
    %v159 = vunpack.c.l.b16 %v121
    %v160 = vunpack.c.l.b16 %v122
    %v161 = vunpack.c.l.b16 %v123
    %v162 = vunpack.c.l.b16 %v124
    %v163 = vunpack.c.l.b16 %v125
    %v164 = vunpack.c.l.b16 %v126
    %v165 = vunpack.c.l.b16 %v127
    %v166 = vunpack.c.l.b16 %v128
    %v167 = vunpack.c.l.b16 %v129
    %v168 = vpack.c.b16 %v153, %v152
    %v169 = vpack.c.b16 %v155, %v154
    %v170 = vpack.c.b16 %v157, %v156
    %v171 = vpack.c.b16 %v159, %v158
    %v172 = vpack.c.b16 %v161, %v160
    %v173 = vpack.c.b16 %v163, %v162
    %v174 = vpack.c.b16 %v165, %v164
    %v175 = vpack.c.b16 %v167, %v166
    %184 = vmatpush.bf16.msra.mxu0 %v175
    %185 = vmatpush.bf16.msra.mxu0 %v174
    %186 = vmatpush.bf16.msra.mxu0 %v173
    %187 = vmatpush.bf16.msra.mxu0 %v172
    %188 = vmatpush.bf16.msra.mxu0 %v171
    %189 = vmatpush.bf16.msra.mxu0 %v170
    %190 = vmatpush.bf16.msra.mxu0 %v169
    %191 = vmatpush.bf16.msra.mxu0 %v168
    %192 = vmatmul.bf16.gmra.mxu0 %v134
    %v193 = vpop.f32.mrf.mxu0
    %v194 = vadd.f32 0.0, %v193
    %v195 = vpop.f32.mrf.mxu0
    %v196 = vadd.f32 0.0, %v195
    %197 = vdwg.mxu0
    %v198 = vadd.f32 %v194, %v196
    %v199 = vrot.slane %v198, 4
    %v200 = vadd.f32 %v198, %v199
    %v201 = vrot.slane %v200, 2
    %v202 = vadd.f32 %v200, %v201
    %v203 = vrot.slane %v202, 1
    %v204 = vadd.f32 %v202, %v203
    %v205 = vmul.f32 %v204, 0.125
    %v206 = vmul.f32 %v194, %v194
    %v207 = vmul.f32 %v196, %v196
    %v208 = vadd.f32 %v206, %v207
    %v209 = vrot.slane %v208, 4
    %v210 = vadd.f32 %v208, %v209
    %v211 = vrot.slane %v210, 2
    %v212 = vadd.f32 %v210, %v211
    %v213 = vrot.slane %v212, 1
    %v214 = vadd.f32 %v212, %v213
    %v215 = vmul.f32 %v214, 0.125
    %v216 = vmul.f32 %v205, %v205
    %v217 = vsub.f32 %v215, %v216
    %v218 = vmax.f32 %v217, 0.0
    %v219 = vld [vmem:[#allocation7] sm:$0x3]
    %v220 = vadd.f32 %v218, 1e-05
    %v221 = vrsqrt.pop %v220
    %v222 = vmul.f32 %v221, %v220
    %v223 = vmul.f32 %v222, %v221
    %v224 = vmul.f32 0.5, %v223
    %v225 = vsub.f32 1.5, %v224
    %v226 = vmul.f32 %v221, %v225
    %vm227 = vweird.f32 %v220
    %vm228 = vweird.f32 %v221
    %vm229 = vmor %vm227, %vm228
    %v230 = vsel %vm229, %v221, %v226
    %v231 = vmul.f32 %v219, %v230
    %v232 = vmul.f32 %v205, %v231
    %v234 = vrot.slane %v232, 7
    %v236 = vsub.f32 %v219, %v234
    %v237 = vperm.slane %v231, 0
    %v238 = vmul.f32 %v194, %v237
    %v239 = vmul.f32 %v196, %v237
    %v240 = vperm.slane %v236, 1
    %v241 = vadd.f32 %v238, %v240
    %v242 = vadd.f32 %v239, %v240
    %vm243 = vcmp.gt.f32.partialorder %v241, 0.0
    %vm244 = vcmp.gt.f32.partialorder %v242, 0.0
    %v245 = vmul.f32 %v241, 0.01
    %v246 = vmul.f32 %v242, 0.01
    %v247 = vsel %vm243, %v241, %v245
    %v248 = vsel %vm244, %v242, %v246
    %v249 = vmul.f32 %v247, %v112
    %v250 = vmul.f32 %v248, %v113
    %v251 = vpack.c.bf16 %v250, %v249
    %v252 = vld [vmem:[#allocation8] sm:$0xf]
    %v253 = vld [vmem:[#allocation8 + $0x4] sm:$0xf]
    %v254 = vld [vmem:[#allocation8 + $0x8] sm:$0xf]
    %v255 = vld [vmem:[#allocation8 + $0xc] sm:$0xf]
    %v256 = vld [vmem:[#allocation8 + $0x10] sm:$0xf]
    %v257 = vld [vmem:[#allocation8 + $0x14] sm:$0xf]
    %v258 = vld [vmem:[#allocation8 + $0x18] sm:$0xf]
    %v259 = vld [vmem:[#allocation8 + $0x1c] sm:$0xf]
    %v260 = vld [vmem:[#allocation8 + $0x20] sm:$0xf]
    %v261 = vld [vmem:[#allocation8 + $0x24] sm:$0xf]
    %v262 = vld [vmem:[#allocation8 + $0x28] sm:$0xf]
    %v263 = vld [vmem:[#allocation8 + $0x2c] sm:$0xf]
    %v264 = vld [vmem:[#allocation8 + $0x30] sm:$0xf]
    %v265 = vld [vmem:[#allocation8 + $0x34] sm:$0xf]
    %v266 = vld [vmem:[#allocation8 + $0x38] sm:$0xf]
    %v267 = vld [vmem:[#allocation8 + $0x3c] sm:$0xf]
    %v284 = vunpack.c.l.b16 %v252
    %v285 = vunpack.c.l.b16 %v253
    %v286 = vunpack.c.l.b16 %v254
    %v287 = vunpack.c.l.b16 %v255
    %v288 = vunpack.c.l.b16 %v256
    %v289 = vunpack.c.l.b16 %v257
    %v290 = vunpack.c.l.b16 %v258
    %v291 = vunpack.c.l.b16 %v259
    %v292 = vunpack.c.l.b16 %v260
    %v293 = vunpack.c.l.b16 %v261
    %v294 = vunpack.c.l.b16 %v262
    %v295 = vunpack.c.l.b16 %v263
    %v296 = vunpack.c.l.b16 %v264
    %v297 = vunpack.c.l.b16 %v265
    %v298 = vunpack.c.l.b16 %v266
    %v299 = vunpack.c.l.b16 %v267
    %v300 = vpack.c.b16 %v285, %v284
    %v301 = vpack.c.b16 %v287, %v286
    %v302 = vpack.c.b16 %v289, %v288
    %v303 = vpack.c.b16 %v291, %v290
    %v304 = vpack.c.b16 %v293, %v292
    %v305 = vpack.c.b16 %v295, %v294
    %v306 = vpack.c.b16 %v297, %v296
    %v307 = vpack.c.b16 %v299, %v298
    %316 = vmatpush.bf16.msra.mxu0 %v307
    %317 = vmatpush.bf16.msra.mxu0 %v306
    %318 = vmatpush.bf16.msra.mxu0 %v305
    %319 = vmatpush.bf16.msra.mxu0 %v304
    %320 = vmatpush.bf16.msra.mxu0 %v303
    %321 = vmatpush.bf16.msra.mxu0 %v302
    %322 = vmatpush.bf16.msra.mxu0 %v301
    %323 = vmatpush.bf16.msra.mxu0 %v300
    %324 = vmatmul.bf16.gmra.mxu0 %v251
    %v325 = vpop.f32.mrf.mxu0
    %v326 = vadd.f32 0.0, %v325
    %v327 = vpop.f32.mrf.mxu0
    %v328 = vadd.f32 0.0, %v327
    %329 = vdwg.mxu0
    %v330 = vadd.f32 %v326, %v328
    %v331 = vrot.slane %v330, 4
    %v332 = vadd.f32 %v330, %v331
    %v333 = vrot.slane %v332, 2
    %v334 = vadd.f32 %v332, %v333
    %v335 = vrot.slane %v334, 1
    %v336 = vadd.f32 %v334, %v335
    %v337 = vmul.f32 %v336, 0.125
    %v338 = vmul.f32 %v326, %v326
    %v339 = vmul.f32 %v328, %v328
    %v340 = vadd.f32 %v338, %v339
    %v341 = vrot.slane %v340, 4
    %v342 = vadd.f32 %v340, %v341
    %v343 = vrot.slane %v342, 2
    %v344 = vadd.f32 %v342, %v343
    %v345 = vrot.slane %v344, 1
    %v346 = vadd.f32 %v344, %v345
    %v347 = vmul.f32 %v346, 0.125
    %v348 = vmul.f32 %v337, %v337
    %v349 = vsub.f32 %v347, %v348
    %v350 = vmax.f32 %v349, 0.0
    %v351 = vld [vmem:[%s4] sm:$0x3]
    %v352 = vadd.f32 %v350, 1e-05
    %v353 = vrsqrt.pop %v352
    %v354 = vmul.f32 %v353, %v352
    %v355 = vmul.f32 %v354, %v353
    %v356 = vmul.f32 0.5, %v355
    %v357 = vsub.f32 1.5, %v356
    %v358 = vmul.f32 %v353, %v357
    %vm359 = vweird.f32 %v352
    %vm360 = vweird.f32 %v353
    %vm361 = vmor %vm359, %vm360
    %v362 = vsel %vm361, %v353, %v358
    %v363 = vmul.f32 %v351, %v362
    %v364 = vmul.f32 %v337, %v363
    %v366 = vrot.slane %v364, 7
    %v368 = vsub.f32 %v351, %v366
    %v369 = vperm.slane %v363, 0
    %v370 = vmul.f32 %v326, %v369
    %v371 = vmul.f32 %v328, %v369
    %v372 = vperm.slane %v368, 1
    %v373 = vadd.f32 %v370, %v372
    %v374 = vadd.f32 %v371, %v372
    %vm375 = vcmp.gt.f32.partialorder %v373, 0.0
    %vm376 = vcmp.gt.f32.partialorder %v374, 0.0
    %v377 = vmul.f32 %v373, 0.01
    %v378 = vmul.f32 %v374, 0.01
    %v379 = vsel %vm375, %v373, %v377
    %v380 = vsel %vm376, %v374, %v378
    %v381 = vmul.f32 %v379, %v112
    %v382 = vmul.f32 %v380, %v113
    %v383 = vpack.c.bf16 %v382, %v381
    %v384 = vld [vmem:[#allocation10] sm:$0xf]
    %v385 = vld [vmem:[#allocation10 + $0x4] sm:$0xf]
    %v386 = vld [vmem:[#allocation10 + $0x8] sm:$0xf]
    %v387 = vld [vmem:[#allocation10 + $0xc] sm:$0xf]
    %v388 = vld [vmem:[#allocation10 + $0x10] sm:$0xf]
    %v389 = vld [vmem:[#allocation10 + $0x14] sm:$0xf]
    %v390 = vld [vmem:[#allocation10 + $0x18] sm:$0xf]
    %v391 = vld [vmem:[#allocation10 + $0x1c] sm:$0xf]
    %v392 = vld [vmem:[#allocation10 + $0x20] sm:$0xf]
    %v393 = vld [vmem:[#allocation10 + $0x24] sm:$0xf]
    %v394 = vld [vmem:[#allocation10 + $0x28] sm:$0xf]
    %v395 = vld [vmem:[#allocation10 + $0x2c] sm:$0xf]
    %v396 = vld [vmem:[#allocation10 + $0x30] sm:$0xf]
    %v397 = vld [vmem:[#allocation10 + $0x34] sm:$0xf]
    %v398 = vld [vmem:[#allocation10 + $0x38] sm:$0xf]
    %v399 = vld [vmem:[#allocation10 + $0x3c] sm:$0xf]
    %v400 = vld [vmem:[%s6] sm:$0x1]
    %v402 = vperm.slane %v400, 0
    %v420 = vunpack.c.l.b16 %v384
    %v421 = vunpack.c.l.b16 %v385
    %v422 = vunpack.c.l.b16 %v386
    %v423 = vunpack.c.l.b16 %v387
    %v424 = vunpack.c.l.b16 %v388
    %v425 = vunpack.c.l.b16 %v389
    %v426 = vunpack.c.l.b16 %v390
    %v427 = vunpack.c.l.b16 %v391
    %v428 = vunpack.c.l.b16 %v392
    %v429 = vunpack.c.l.b16 %v393
    %v430 = vunpack.c.l.b16 %v394
    %v431 = vunpack.c.l.b16 %v395
    %v432 = vunpack.c.l.b16 %v396
    %v433 = vunpack.c.l.b16 %v397
    %v434 = vunpack.c.l.b16 %v398
    %v435 = vunpack.c.l.b16 %v399
    %v436 = vpack.c.b16 %v421, %v420
    %v437 = vpack.c.b16 %v423, %v422
    %v438 = vpack.c.b16 %v425, %v424
    %v439 = vpack.c.b16 %v427, %v426
    %v440 = vpack.c.b16 %v429, %v428
    %v441 = vpack.c.b16 %v431, %v430
    %v442 = vpack.c.b16 %v433, %v432
    %v443 = vpack.c.b16 %v435, %v434
    %452 = vmatpush.bf16.msra.mxu0 %v443
    %453 = vmatpush.bf16.msra.mxu0 %v442
    %454 = vmatpush.bf16.msra.mxu0 %v441
    %455 = vmatpush.bf16.msra.mxu0 %v440
    %456 = vmatpush.bf16.msra.mxu0 %v439
    %457 = vmatpush.bf16.msra.mxu0 %v438
    %458 = vmatpush.bf16.msra.mxu0 %v437
    %459 = vmatpush.bf16.msra.mxu0 %v436
    %460 = vmatmul.bf16.gmra.mxu0 %v383
    %v461 = vpop.f32.mrf.mxu0
    %v462 = vadd.f32 %v402, %v461
    %v463 = vpop.f32.mrf.mxu0
    %v464 = vadd.f32 %v402, %v463
    %465 = vdwg.mxu0
    %466 = vst [vmem:[#allocation11] sm:$0xff] %v462
    %467 = vst [vmem:[#allocation11 + $0x8] sm:$0xff] %v464
    // Predicated region
    $region50: #{tpu_custom_call.1} parent=1 // pred_check
      _
    $region51: #{tpu_custom_call.1} parent=1 // pred_check_branch
      %469 = sbr.rel (0) target = $region53
    $region52: #{tpu_custom_call.1} parent=1 // pred_region
      %471 = vsyncadd [#allocation4], 0
      %s472 = sshll.u32 [#allocation11], 4
      %s473 = int_to_ptr.vmem [resolvable:$true] %s472
      %s474 = sshll.u32 %s7, 4
      %s475 = int_to_ptr.hbm [resolvable:$true] %s474
      %480 = dma.vmem_to_hbm [thread:$0]  %s473, 256, %s475, [#allocation4], 128, 128, 8
    $region53: #{tpu_custom_call.1} parent=1 // pred_fallthru
      _
    // Predicated region
    $region54: #{tpu_custom_call.1} parent=1 // pred_check
      _
    $region55: #{tpu_custom_call.1} parent=1 // pred_check_branch
      %482 = sbr.rel (0) target = $region57
    $region56: #{tpu_custom_call.1} parent=1 // pred_region
      %484 = dma.done [#allocation4], 256
    $region57: #{tpu_custom_call.1} parent=1 // pred_fallthru
      _
    %485 = vsyncpa [#allocation3], 1
    %486 = vsyncpa [#allocation6], 1
    %487 = vsyncpa [#allocation9], 1
    %488 = vsyncpa [#allocation4], 1

</llo_original>
